<compile_context>
chip_gen: v7x
topology: tpu7x:2x2x1
jax: 0.10.0
libtpu: 0.0.40
codegen_flags: <defaults>
</compile_context>

<pallas_src>
import functools

import jax
import jax.numpy as jnp
import numpy as np
from jax.experimental import pallas as pl
from jax.experimental.pallas import tpu as pltpu


# ---------------------------------------------------------------------------
# Pallas kernel: one dense ChebConv(K=2) layer (+ fused activation)
# ---------------------------------------------------------------------------
def _cheb_layer_kernel(lhat_ref, x_ref, w0_ref, w1_ref, bias_ref, out_ref,
                       *, tile_m, activation, valid_cols):
    # lhat_ref : [TM, Np]  rows of the scaled Laplacian for this dst tile
    # x_ref    : [Np, Fp]  full (padded) node features, resident in VMEM
    # w0_ref   : [Fp, Cp]  Chebyshev weight for T0(x) = x
    # w1_ref   : [Fp, Cp]  Chebyshev weight for T1(x) = L_hat @ x
    # bias_ref : [1,  Cp]
    # out_ref  : [TM, Cp]
    i = pl.program_id(0)
    start = pl.multiple_of(i * tile_m, tile_m)
    x_tile = x_ref[pl.ds(start, tile_m), :]                       # [TM, Fp]

    # T1 = L_hat @ x for this tile's destination rows (MXU).
    tx1 = jnp.dot(lhat_ref[...], x_ref[...],
                  preferred_element_type=jnp.float32)             # [TM, Fp]

    # out = T0 @ W0 + T1 @ W1 + b   (f32 accumulation on the MXU)
    y = jnp.dot(x_tile, w0_ref[...], preferred_element_type=jnp.float32)
    y = y + jnp.dot(tx1, w1_ref[...], preferred_element_type=jnp.float32)
    y = y + bias_ref[...]

    if activation == "relu":
        y = jnp.maximum(y, 0.0)
    elif activation == "log_softmax":
        # Mask out padded class columns so they do not affect the row softmax.
        col = jax.lax.broadcasted_iota(jnp.int32, y.shape, 1)
        y = jnp.where(col < valid_cols, y, -1e30)
        m = jnp.max(y, axis=1, keepdims=True)
        z = y - m
        y = z - jnp.log(jnp.sum(jnp.exp(z), axis=1, keepdims=True))

    # Single lane-dense store of the full [TM, Cp] block.
    out_ref[...] = y


def cheb_layer(x_p, lhat_p, w0_p, w1_p, b_p, *, tile_m, activation, valid_cols):
    """Dense ChebConv (K=2) with fused activation, gridded over node tiles."""
    n_p, f_p = x_p.shape
    c_p = w0_p.shape[1]
    grid = (pl.cdiv(n_p, tile_m),)
    kernel = functools.partial(_cheb_layer_kernel, tile_m=tile_m,
                               activation=activation, valid_cols=valid_cols)
    return pl.pallas_call(
        kernel,
        out_shape=jax.ShapeDtypeStruct((n_p, c_p), jnp.float32),
        grid=grid,
        in_specs=[
            pl.BlockSpec((tile_m, n_p), lambda i: (i, 0)),   # L_hat rows (streamed)
            pl.BlockSpec((n_p, f_p), lambda i: (0, 0)),      # full x (resident)
            pl.BlockSpec((f_p, c_p), lambda i: (0, 0)),      # W0
            pl.BlockSpec((f_p, c_p), lambda i: (0, 0)),      # W1
            pl.BlockSpec((1, c_p), lambda i: (0, 0)),        # bias
        ],
        out_specs=pl.BlockSpec((tile_m, c_p), lambda i: (i, 0)),
        compiler_params=pltpu.CompilerParams(
            dimension_semantics=("parallel",)),
    )(lhat_p, x_p, w0_p, w1_p, b_p)


# ---------------------------------------------------------------------------
# Padding helpers + model wrapper
# ---------------------------------------------------------------------------
def _round_up(v, m):
    return (v + m - 1) // m * m


def _pad2(a, rows, cols):
    out = jnp.zeros((rows, cols), jnp.float32)
    return out.at[:a.shape[0], :a.shape[1]].set(a.astype(jnp.float32))


def init_params(key, num_features, num_classes, hidden=16):
    ks = jax.random.split(key, 6)

    def init(k, shape):
        return (0.1 * jax.random.normal(k, shape)).astype(jnp.float32)

    return {
        "W1_0": init(ks[0], (num_features, hidden)),
        "W1_1": init(ks[1], (num_features, hidden)),
        "b1":   init(ks[2], (hidden,)),
        "W2_0": init(ks[3], (hidden, num_classes)),
        "W2_1": init(ks[4], (hidden, num_classes)),
        "b2":   init(ks[5], (num_classes,)),
    }


def dfa_cheb_net(params, x, lhat, *, tile_m=128):
    """Forward pass of DFAChebNet (dropout p=0.0 and DFA layers are identity)."""
    # TODO(synk): DFALayer/DFA only inject feedback in the backward pass; the
    # forward pass is identity, so no kernel is emitted for them.
    n, f = x.shape
    hidden = params["W1_0"].shape[1]
    num_classes = params["W2_0"].shape[1]

    n_p = _round_up(max(n, tile_m), tile_m)
    f_p = _round_up(f, 128)
    h_p = _round_up(hidden, 128)
    c_p = _round_up(num_classes, 128)

    x_p = _pad2(x, n_p, f_p)
    lhat_p = _pad2(lhat, n_p, n_p)

    h = cheb_layer(
        x_p, lhat_p,
        _pad2(params["W1_0"], f_p, h_p),
        _pad2(params["W1_1"], f_p, h_p),
        _pad2(params["b1"].reshape(1, -1), 1, h_p),
        tile_m=tile_m, activation="relu", valid_cols=hidden)

    out = cheb_layer(
        h, lhat_p,
        _pad2(params["W2_0"], h_p, c_p),
        _pad2(params["W2_1"], h_p, c_p),
        _pad2(params["b2"].reshape(1, -1), 1, c_p),
        tile_m=tile_m, activation="log_softmax", valid_cols=num_classes)

    return out[:n, :num_classes]


# ---------------------------------------------------------------------------
# Pure-JAX reference (for correctness check)
# ---------------------------------------------------------------------------
def _cheb_ref(x, lhat, w0, w1, b):
    return x @ w0 + (lhat @ x) @ w1 + b


def _net_ref(params, x, lhat):
    h = jax.nn.relu(_cheb_ref(x, lhat, params["W1_0"], params["W1_1"],
                              params["b1"]))
    y = _cheb_ref(h, lhat, params["W2_0"], params["W2_1"], params["b2"])
    return jax.nn.log_softmax(y, axis=1)


# ---------------------------------------------------------------------------
# Main
# ---------------------------------------------------------------------------
if __name__ == "__main__":
    num_nodes = 200
    num_features = 20
    num_classes = 5

    key = jax.random.PRNGKey(0)
    kx, kp = jax.random.split(key)

    # Node features (data.x)
    x = jax.random.normal(kx, (num_nodes, num_features), dtype=jnp.float32)

    # Graph (data.edge_index / data.edge_attr): symmetric weighted adjacency
    # (ring + chord edges), no self loops.
    rng = np.random.RandomState(0)
    A = np.zeros((num_nodes, num_nodes), dtype=np.float32)
    idx = np.arange(num_nodes)
    w_ring = rng.uniform(0.5, 1.5, num_nodes).astype(np.float32)
    A[idx, (idx + 1) % num_nodes] = w_ring
    A[(idx + 1) % num_nodes, idx] = w_ring
    w_chord = rng.uniform(0.5, 1.5, num_nodes).astype(np.float32)
    A[idx, (idx + 7) % num_nodes] = w_chord
    A[(idx + 7) % num_nodes, idx] = w_chord

    # Scaled Laplacian used by ChebConv('sym', lambda_max=2):
    #   L_hat = (2/lambda_max) * (I - D^{-1/2} A D^{-1/2}) - I
    #         = -D^{-1/2} A D^{-1/2}
    deg = A.sum(axis=1)
    dinv = np.where(deg > 0, 1.0 / np.sqrt(np.maximum(deg, 1e-12)), 0.0)
    lhat_np = -(dinv[:, None] * A * dinv[None, :]).astype(np.float32)
    lhat = jnp.asarray(lhat_np)

    params = init_params(kp, num_features, num_classes)

    out = dfa_cheb_net(params, x, lhat)
    out = jax.block_until_ready(out)

    ref = _net_ref(params, x, lhat)
    np.testing.assert_allclose(np.asarray(out), np.asarray(ref),
                               rtol=1e-3, atol=1e-3)
    assert out.shape == (num_nodes, num_classes)

    print("KERNEL_OK")
</pallas_src>

<mosaic_0001>
module attributes {stable_mosaic.version = 11 : i64} {
  func.func @_cheb_layer_kernel(%arg0: i32, %arg1: memref<128x256xf32, #tpu.memory_space<vmem>>, %arg2: memref<256x128xf32, #tpu.memory_space<vmem>>, %arg3: memref<128x128xf32, #tpu.memory_space<vmem>>, %arg4: memref<128x128xf32, #tpu.memory_space<vmem>>, %arg5: memref<1x128xf32, #tpu.memory_space<vmem>>, %arg6: memref<128x128xf32, #tpu.memory_space<vmem>>) attributes {dimension_semantics = [#tpu.dimension_semantics<parallel>], iteration_bounds = array<i64: 2>, scalar_prefetch = 0 : i64, scratch_operands = 0 : i64, tpu.core_type = #tpu.core_type<tc>, window_params = [{transform_indices = @transform_0, window_bounds = array<i64: 128, 256>}, {pipeline_mode = #tpu.pipeline_mode<synchronous>, transform_indices = @transform_1, window_bounds = array<i64: 256, 128>}, {pipeline_mode = #tpu.pipeline_mode<synchronous>, transform_indices = @transform_2, window_bounds = array<i64: 128, 128>}, {pipeline_mode = #tpu.pipeline_mode<synchronous>, transform_indices = @transform_3, window_bounds = array<i64: 128, 128>}, {pipeline_mode = #tpu.pipeline_mode<synchronous>, transform_indices = @transform_4, window_bounds = array<i64: 1, 128>}, {transform_indices = @transform_5, window_bounds = array<i64: 128, 128>}]} {
    %c128_i32 = arith.constant 128 : i32
    %0 = arith.muli %arg0, %c128_i32 : i32
    %1 = tpu.assume_multiple %0, 128 : i32
    %2 = arith.index_cast %1 : i32 to index
    %c0 = arith.constant 0 : index
    %3 = vector.load %arg2[%2, %c0] : memref<256x128xf32, #tpu.memory_space<vmem>>, vector<128x128xf32>
    %c0_0 = arith.constant 0 : index
    %c0_1 = arith.constant 0 : index
    %4 = vector.load %arg1[%c0_0, %c0_1] : memref<128x256xf32, #tpu.memory_space<vmem>>, vector<128x256xf32>
    %c0_2 = arith.constant 0 : index
    %c0_3 = arith.constant 0 : index
    %5 = vector.load %arg2[%c0_2, %c0_3] : memref<256x128xf32, #tpu.memory_space<vmem>>, vector<256x128xf32>
    %cst = arith.constant dense<0.000000e+00> : vector<128x128xf32>
    %6 = tpu.matmul %4, %5, %cst {dimension_numbers = #tpu.dot_dimension_numbers<[1], [0], [0], [1], [0, 0, 1, 1], [], []>} : vector<128x256xf32>, vector<256x128xf32>, vector<128x128xf32> -> vector<128x128xf32>
    %c0_4 = arith.constant 0 : index
    %c0_5 = arith.constant 0 : index
    %7 = vector.load %arg3[%c0_4, %c0_5] : memref<128x128xf32, #tpu.memory_space<vmem>>, vector<128x128xf32>
    %cst_6 = arith.constant dense<0.000000e+00> : vector<128x128xf32>
    %8 = tpu.matmul %3, %7, %cst_6 {dimension_numbers = #tpu.dot_dimension_numbers<[1], [0], [0], [1], [0, 0, 1, 1], [], []>} : vector<128x128xf32>, vector<128x128xf32>, vector<128x128xf32> -> vector<128x128xf32>
    %c0_7 = arith.constant 0 : index
    %c0_8 = arith.constant 0 : index
    %9 = vector.load %arg4[%c0_7, %c0_8] : memref<128x128xf32, #tpu.memory_space<vmem>>, vector<128x128xf32>
    %cst_9 = arith.constant dense<0.000000e+00> : vector<128x128xf32>
    %10 = tpu.matmul %6, %9, %cst_9 {dimension_numbers = #tpu.dot_dimension_numbers<[1], [0], [0], [1], [0, 0, 1, 1], [], []>} : vector<128x128xf32>, vector<128x128xf32>, vector<128x128xf32> -> vector<128x128xf32>
    %11 = arith.addf %8, %10 : vector<128x128xf32>
    %c0_10 = arith.constant 0 : index
    %c0_11 = arith.constant 0 : index
    %12 = vector.load %arg5[%c0_10, %c0_11] : memref<1x128xf32, #tpu.memory_space<vmem>>, vector<1x128xf32>
    %13 = vector.broadcast %12 : vector<1x128xf32> to vector<128x128xf32>
    %14 = arith.addf %11, %13 : vector<128x128xf32>
    %cst_12 = arith.constant 0.000000e+00 : f32
    %15 = vector.broadcast %cst_12 : f32 to vector<128x128xf32>
    %16 = arith.maximumf %14, %15 : vector<128x128xf32>
    %c0_13 = arith.constant 0 : index
    %c0_14 = arith.constant 0 : index
    %17 = vector.load %arg6[%c0_13, %c0_14] : memref<128x128xf32, #tpu.memory_space<vmem>>, vector<128x128xf32>
    tpu.vector_store %arg6[%c0_13, %c0_14], %16 {strides = array<i32>} : memref<128x128xf32, #tpu.memory_space<vmem>>, vector<128x128xf32>,
    return
  }
  func.func @transform_0(%arg0: i32) -> (i32, i32) {
    %c0_i32 = arith.constant 0 : i32
    %c0_i32_0 = arith.constant 0 : i32
    return %arg0, %c0_i32 : i32, i32
  }
  func.func @transform_1(%arg0: i32) -> (i32, i32) {
    %c0_i32 = arith.constant 0 : i32
    %c0_i32_0 = arith.constant 0 : i32
    %c0_i32_1 = arith.constant 0 : i32
    return %c0_i32, %c0_i32_0 : i32, i32
  }
  func.func @transform_2(%arg0: i32) -> (i32, i32) {
    %c0_i32 = arith.constant 0 : i32
    %c0_i32_0 = arith.constant 0 : i32
    %c0_i32_1 = arith.constant 0 : i32
    return %c0_i32, %c0_i32_0 : i32, i32
  }
  func.func @transform_3(%arg0: i32) -> (i32, i32) {
    %c0_i32 = arith.constant 0 : i32
    %c0_i32_0 = arith.constant 0 : i32
    %c0_i32_1 = arith.constant 0 : i32
    return %c0_i32, %c0_i32_0 : i32, i32
  }
  func.func @transform_4(%arg0: i32) -> (i32, i32) {
    %c0_i32 = arith.constant 0 : i32
    %c0_i32_0 = arith.constant 0 : i32
    %c0_i32_1 = arith.constant 0 : i32
    return %c0_i32, %c0_i32_0 : i32, i32
  }
  func.func @transform_5(%arg0: i32) -> (i32, i32) {
    %c0_i32 = arith.constant 0 : i32
    %c0_i32_0 = arith.constant 0 : i32
    return %arg0, %c0_i32 : i32, i32
  }
}

</mosaic_0001>

<llo_original>
// kernel: tpu_custom_call.1
$region0: #{tpu_custom_call.1}
  #allocation0 [shape = 'u32[]', space=smem, size = 0x4, offset = 0x4, fixed_abs, tag = 'smem constant byte address 0x4 - core index']
  #allocation1 [shape = 'u32[144,128]{1,0:T(1,128)}', space=vmem, size = 0x12000, scoped, tag = 'internal scratch']
  %s0 = inlined_call_operand.hbm [shape: f32[256,256], index: 0, kind: input, shape index: {}]
  %s1 = inlined_call_operand.hbm [shape: f32[256,128], index: 1, kind: input, shape index: {}]
  %s2 = inlined_call_operand.hbm [shape: f32[128,128], index: 2, kind: input, shape index: {}]
  %s3 = inlined_call_operand.hbm [shape: f32[128,128], index: 3, kind: input, shape index: {}]
  %s4 = inlined_call_operand.vmem [shape: f32[1,128], index: 4, kind: input, shape index: {}]
  %s5 = inlined_call_operand.hbm [shape: f32[256,128], index: 5, kind: output, shape index: {}]
  %s6 = sld [smem:[#allocation0]]
  $region69: #{tpu_custom_call.1} parent=0
    _
  %s8 = ssub.s32 1, %s6
  %s9 = scalar_select 0, %s8, %s6
  $region1: #{tpu_custom_call.1} parent=0
    #allocation2 [shape = 'u8[262144]{0}', space=vmem, size = 0x40000, scoped, tag = 'input window, operand 0']
    #allocation3 [shape = 's32[2]{0}', space=sflag, size = 0x8, scoped, tag = 'scoped memory for tpu_custom_call.1']
    #allocation4 [shape = 's32[2]{0}', space=sflag, size = 0x8, scoped, tag = 'scoped memory for tpu_custom_call.1']
    #allocation5 [shape = 'u8[131072]{0}', space=vmem, size = 0x20000, scoped, tag = 'input window, operand 1, single buffered']
    #allocation6 [shape = 's32[1]{0}', space=sflag, size = 0x4, scoped, tag = 'scoped memory for tpu_custom_call.1']
    #allocation7 [shape = 'u8[65536]{0}', space=vmem, size = 0x10000, scoped, tag = 'input window, operand 2, single buffered']
    #allocation8 [shape = 'u8[65536]{0}', space=vmem, size = 0x10000, scoped, tag = 'input window, operand 3, single buffered']
    #allocation9 [shape = 's32[1]{0}', space=sflag, size = 0x4, scoped, tag = 'scoped memory for tpu_custom_call.1']
    #allocation10 [shape = 'u8[131072]{0}', space=vmem, size = 0x20000, scoped, tag = 'output window, operand 0']
    %10 = vsyncpa [#allocation3], 0
    %s11 = scalar_lea.sflag [#allocation3], 1
    %12 = vsyncpa %s11, 0
    %13 = vsyncpa [#allocation6], 0
    %14 = vsyncpa [#allocation9], 0
    %15 = vsyncpa [#allocation4], 0
    %s16 = scalar_lea.sflag [#allocation4], 1
    %17 = vsyncpa %s16, 0
    loop: start=0, step=1, limit=4
    $region2: #{tpu_custom_call.1} parent=1 // loop_pre_header
      _
    $region3: #{tpu_custom_call.1} parent=1 // loop_header
      %s19 = sphi 0, %s23
      %p20 = scmp.ge.s32.totalorder %s19, 4
      %s29 = sphi 0, %s31
      %s32 = sphi 0, %s29
      %s33 = sphi 0, %s32
      %s49 = sphi 0, %s33
      %s53 = sphi 0, %s53
      %s55 = sphi 0, %s53
      %s56 = sphi 0, %s55
      %s70 = sphi 0, %s56
      %s74 = sphi 0, %s74
      %s76 = sphi 0, %s74
      %s77 = sphi 0, %s76
      %s91 = sphi 0, %s77
      %s95 = sphi 0, %s95
      %s97 = sphi 0, %s95
      %s98 = sphi 0, %s97
      %s112 = sphi 0, %s98
      %s116 = sphi 0, %s116
      %s118 = sphi 0, %s116
      %s119 = sphi 0, %s118
      %s133 = sphi 0, %s119
      %s139 = sphi 0, %s141
      %s142 = sphi 0, %s139
      %s143 = sphi 0, %s142
      %s159 = sphi 0, %s143
    $region4: #{tpu_custom_call.1} parent=1 // loop_header_branch
      %22 = sbr.rel (%p20) target = $region8
    $region5: #{tpu_custom_call.1} parent=1 // loop_body
      %s24 = ssub.s32 %s19, 1
      %s25 = ssub.s32 %s19, 2
      %s26 = sadd.s32 %s19, 1
      %s27 = ssub.s32 %s19, %s26
      %p28 = scmp.eq.s32.totalorder %s27, 0
      %s30 = sadd.s32 %s29, 1
      %s31 = scalar_select %p28, %s29, %s30
      %p34 = pneg %p28
      %p35 = scmp.eq.s32.totalorder %s19, 1
      %p36 = por %p34, %p35
      %p37 = scmp.ne.s32.totalorder %s29, %s32
      %p38 = scmp.eq.s32.totalorder %s19, 0
      %p39 = por %p37, %p38
      %p40 = scmp.ne.s32.totalorder %s29, %s32
      %p41 = scmp.eq.s32.totalorder %s24, 1
      %p42 = por %p40, %p41
      %p43 = scmp.ne.s32.totalorder %s32, %s33
      %p44 = scmp.eq.s32.totalorder %s24, 0
      %p45 = por %p43, %p44
      %p46 = scmp.ne.s32.totalorder %s32, %s33
      %p47 = scmp.eq.s32.totalorder %s25, 1
      %p48 = por %p46, %p47
      %p50 = scmp.ne.s32.totalorder %s33, %s49
      %p51 = scmp.eq.s32.totalorder %s25, 0
      %p52 = por %p50, %p51
      %s54 = sadd.s32 %s53, 1
      %p57 = scmp.eq.s32.totalorder %s19, 1
      %p58 = scmp.ne.s32.totalorder %s53, %s55
      %p59 = scmp.eq.s32.totalorder %s19, 0
      %p60 = por %p58, %p59
      %p61 = scmp.ne.s32.totalorder %s53, %s55
      %p62 = scmp.eq.s32.totalorder %s24, 1
      %p63 = por %p61, %p62
      %p64 = scmp.ne.s32.totalorder %s55, %s56
      %p65 = scmp.eq.s32.totalorder %s24, 0
      %p66 = por %p64, %p65
      %p67 = scmp.ne.s32.totalorder %s55, %s56
      %p68 = scmp.eq.s32.totalorder %s25, 1
      %p69 = por %p67, %p68
      %p71 = scmp.ne.s32.totalorder %s56, %s70
      %p72 = scmp.eq.s32.totalorder %s25, 0
      %p73 = por %p71, %p72
      %s75 = sadd.s32 %s74, 1
      %p78 = scmp.eq.s32.totalorder %s19, 1
      %p79 = scmp.ne.s32.totalorder %s74, %s76
      %p80 = scmp.eq.s32.totalorder %s19, 0
      %p81 = por %p79, %p80
      %p82 = scmp.ne.s32.totalorder %s74, %s76
      %p83 = scmp.eq.s32.totalorder %s24, 1
      %p84 = por %p82, %p83
      %p85 = scmp.ne.s32.totalorder %s76, %s77
      %p86 = scmp.eq.s32.totalorder %s24, 0
      %p87 = por %p85, %p86
      %p88 = scmp.ne.s32.totalorder %s76, %s77
      %p89 = scmp.eq.s32.totalorder %s25, 1
      %p90 = por %p88, %p89
      %p92 = scmp.ne.s32.totalorder %s77, %s91
      %p93 = scmp.eq.s32.totalorder %s25, 0
      %p94 = por %p92, %p93
      %s96 = sadd.s32 %s95, 1
      %p99 = scmp.eq.s32.totalorder %s19, 1
      %p100 = scmp.ne.s32.totalorder %s95, %s97
      %p101 = scmp.eq.s32.totalorder %s19, 0
      %p102 = por %p100, %p101
      %p103 = scmp.ne.s32.totalorder %s95, %s97
      %p104 = scmp.eq.s32.totalorder %s24, 1
      %p105 = por %p103, %p104
      %p106 = scmp.ne.s32.totalorder %s97, %s98
      %p107 = scmp.eq.s32.totalorder %s24, 0
      %p108 = por %p106, %p107
      %p109 = scmp.ne.s32.totalorder %s97, %s98
      %p110 = scmp.eq.s32.totalorder %s25, 1
      %p111 = por %p109, %p110
      %p113 = scmp.ne.s32.totalorder %s98, %s112
      %p114 = scmp.eq.s32.totalorder %s25, 0
      %p115 = por %p113, %p114
      %s117 = sadd.s32 %s116, 1
      %p120 = scmp.eq.s32.totalorder %s19, 1
      %p121 = scmp.ne.s32.totalorder %s116, %s118
      %p122 = scmp.eq.s32.totalorder %s19, 0
      %p123 = por %p121, %p122
      %p124 = scmp.ne.s32.totalorder %s116, %s118
      %p125 = scmp.eq.s32.totalorder %s24, 1
      %p126 = por %p124, %p125
      %p127 = scmp.ne.s32.totalorder %s118, %s119
      %p128 = scmp.eq.s32.totalorder %s24, 0
      %p129 = por %p127, %p128
      %p130 = scmp.ne.s32.totalorder %s118, %s119
      %p131 = scmp.eq.s32.totalorder %s25, 1
      %p132 = por %p130, %p131
      %p134 = scmp.ne.s32.totalorder %s119, %s133
      %p135 = scmp.eq.s32.totalorder %s25, 0
      %p136 = por %p134, %p135
      %s137 = ssub.s32 %s19, %s26
      %p138 = scmp.eq.s32.totalorder %s137, 0
      %s140 = sadd.s32 %s139, 1
      %s141 = scalar_select %p138, %s139, %s140
      %p144 = pneg %p138
      %p145 = scmp.eq.s32.totalorder %s19, 1
      %p146 = por %p144, %p145
      %p147 = scmp.ne.s32.totalorder %s139, %s142
      %p148 = scmp.eq.s32.totalorder %s19, 0
      %p149 = por %p147, %p148
      %p150 = scmp.ne.s32.totalorder %s139, %s142
      %p151 = scmp.eq.s32.totalorder %s24, 1
      %p152 = por %p150, %p151
      %p153 = scmp.ne.s32.totalorder %s142, %s143
      %p154 = scmp.eq.s32.totalorder %s24, 0
      %p155 = por %p153, %p154
      %p156 = scmp.ne.s32.totalorder %s142, %s143
      %p157 = scmp.eq.s32.totalorder %s25, 1
      %p158 = por %p156, %p157
      %p160 = scmp.ne.s32.totalorder %s143, %s159
      %p161 = scmp.eq.s32.totalorder %s25, 0
      %p162 = por %p160, %p161
      %p163 = scmp.le.s32.totalorder 1, %s19
      %p164 = scmp.lt.s32.totalorder %s19, 3
      %p165 = pnand %p163, %p164
      %p166 = pneg %p165
      // Predicated region
      $region9: #{tpu_custom_call.1} parent=5 // pred_check
        _
      $region10: #{tpu_custom_call.1} parent=5 // pred_check_branch
        %168 = sbr.rel (%p165) target = $region12
      $region11: #{tpu_custom_call.1} parent=5 // pred_region
        %s169 = ssub.s32 %s19, 1
        // Predicated region
        $region13: #{tpu_custom_call.1} parent=11 // pred_check
          %p170 = pneg %p66
        $region14: #{tpu_custom_call.1} parent=11 // pred_check_branch
          %172 = sbr.rel (%p170) target = $region16
        $region15: #{tpu_custom_call.1} parent=11 // pred_region
          %s174 = ssub.s32 4096, 4096
          %175 = vsyncadd [#allocation6], %s174
          %s176 = sshll.u32 [#allocation5], 4
          %s177 = int_to_ptr.vmem [resolvable:$true] %s176
          %182 = dma.hbm_to_vmem [thread:$0]  %s1, 4096, %s177, [#allocation6], 128, 128, 8
        $region16: #{tpu_custom_call.1} parent=11 // pred_fallthru
          _
        // Predicated region
        $region17: #{tpu_custom_call.1} parent=11 // pred_check
          %p183 = pneg %p87
        $region18: #{tpu_custom_call.1} parent=11 // pred_check_branch
          %185 = sbr.rel (%p183) target = $region20
        $region19: #{tpu_custom_call.1} parent=11 // pred_region
          %s187 = ssub.s32 2048, 2048
          %188 = vsyncadd [#allocation6], %s187
          %s189 = sshll.u32 [#allocation7], 4
          %s190 = int_to_ptr.vmem [resolvable:$true] %s189
          %195 = dma.hbm_to_vmem [thread:$0]  %s2, 2048, %s190, [#allocation6], 128, 128, 8
        $region20: #{tpu_custom_call.1} parent=11 // pred_fallthru
          _
        // Predicated region
        $region21: #{tpu_custom_call.1} parent=11 // pred_check
          %p196 = pneg %p108
        $region22: #{tpu_custom_call.1} parent=11 // pred_check_branch
          %198 = sbr.rel (%p196) target = $region24
        $region23: #{tpu_custom_call.1} parent=11 // pred_region
          %s200 = ssub.s32 2048, 2048
          %201 = vsyncadd [#allocation9], %s200
          %s202 = sshll.u32 [#allocation8], 4
          %s203 = int_to_ptr.vmem [resolvable:$true] %s202
          %208 = dma.hbm_to_vmem [thread:$0]  %s3, 2048, %s203, [#allocation9], 128, 128, 8
        $region24: #{tpu_custom_call.1} parent=11 // pred_fallthru
          _
        // Predicated region
        $region25: #{tpu_custom_call.1} parent=11 // pred_check
          %p209 = pneg %p129
        $region26: #{tpu_custom_call.1} parent=11 // pred_check_branch
          %211 = sbr.rel (%p209) target = $region28
        $region27: #{tpu_custom_call.1} parent=11 // pred_region
          _
        $region28: #{tpu_custom_call.1} parent=11 // pred_fallthru
          _
      $region12: #{tpu_custom_call.1} parent=5 // pred_fallthru
        _
      %p212 = scmp.lt.s32.totalorder %s19, 2
      // Predicated region
      $region29: #{tpu_custom_call.1} parent=5 // pred_check
        %p213 = pneg %p212
      $region30: #{tpu_custom_call.1} parent=5 // pred_check_branch
        %215 = sbr.rel (%p213) target = $region32
      $region31: #{tpu_custom_call.1} parent=5 // pred_region
        // Predicated region
        $region33: #{tpu_custom_call.1} parent=31 // pred_check
          %p216 = pneg %p39
        $region34: #{tpu_custom_call.1} parent=31 // pred_check_branch
          %218 = sbr.rel (%p216) target = $region36
        $region35: #{tpu_custom_call.1} parent=31 // pred_region
          %s219 = sand.u32 %s29, 1
          %s220 = scalar_lea.sflag [#allocation3], %s219
          %s221 = sand.u32 %s29, 1
          %s222 = smul.addr %s221, 256
          %s223 = scalar_lea.vmem [#allocation2], %s222
          %s224 = smul.u32 16, %s19
          %s226 = ssub.s32 4096, 4096
          %227 = vsyncadd %s220, %s226
          %s228 = smul.addr %s224, 2
          %s229 = smul.addr %s228, 128
          %s230 = scalar_lea.hbm %s0, %s229
          %s231 = sshll.u32 %s223, 4
          %s232 = int_to_ptr.vmem [resolvable:$true] %s231
          %237 = dma.hbm_to_vmem [thread:$0]  %s230, 4096, %s232, %s220, 256, 256, 16
        $region36: #{tpu_custom_call.1} parent=31 // pred_fallthru
          _
      $region32: #{tpu_custom_call.1} parent=5 // pred_fallthru
        _
      %p238 = scmp.le.s32.totalorder 1, %s19
      %p239 = scmp.lt.s32.totalorder %s19, 3
      %p240 = pnand %p238, %p239
      %p241 = pneg %p240
      // Predicated region
      $region37: #{tpu_custom_call.1} parent=5 // pred_check
        _
      $region38: #{tpu_custom_call.1} parent=5 // pred_check_branch
        %243 = sbr.rel (%p240) target = $region40
      $region39: #{tpu_custom_call.1} parent=5 // pred_region
        %s244 = ssub.s32 %s19, 1
        %s245 = sand.u32 %s32, 1
        %s246 = scalar_lea.sflag [#allocation3], %s245
        %s247 = sand.u32 %s32, 1
        %s248 = smul.addr %s247, 256
        %s249 = scalar_lea.vmem [#allocation2], %s248
        // Predicated region
        $region41: #{tpu_custom_call.1} parent=39 // pred_check
          %p250 = pneg %p45
        $region42: #{tpu_custom_call.1} parent=39 // pred_check_branch
          %252 = sbr.rel (%p250) target = $region44
        $region43: #{tpu_custom_call.1} parent=39 // pred_region
          %253 = dma.done %s246, 4096
        $region44: #{tpu_custom_call.1} parent=39 // pred_fallthru
          _
        // Predicated region
        $region45: #{tpu_custom_call.1} parent=39 // pred_check
          %p254 = pneg %p66
        $region46: #{tpu_custom_call.1} parent=39 // pred_check_branch
          %256 = sbr.rel (%p254) target = $region48
        $region47: #{tpu_custom_call.1} parent=39 // pred_region
          %257 = dma.done [#allocation6], 4096
        $region48: #{tpu_custom_call.1} parent=39 // pred_fallthru
          _
        // Predicated region
        $region49: #{tpu_custom_call.1} parent=39 // pred_check
          %p258 = pneg %p87
        $region50: #{tpu_custom_call.1} parent=39 // pred_check_branch
          %260 = sbr.rel (%p258) target = $region52
        $region51: #{tpu_custom_call.1} parent=39 // pred_region
          %261 = dma.done [#allocation6], 2048
        $region52: #{tpu_custom_call.1} parent=39 // pred_fallthru
          _
        // Predicated region
        $region53: #{tpu_custom_call.1} parent=39 // pred_check
          %p262 = pneg %p108
        $region54: #{tpu_custom_call.1} parent=39 // pred_check_branch
          %264 = sbr.rel (%p262) target = $region56
        $region55: #{tpu_custom_call.1} parent=39 // pred_region
          %265 = dma.done [#allocation9], 2048
        $region56: #{tpu_custom_call.1} parent=39 // pred_fallthru
          _
        %s266 = sand.u32 %s32, 1
        %s267 = scalar_lea.sflag [#allocation3], %s266
        %s268 = sand.u32 %s32, 1
        %s269 = smul.addr %s268, 256
        %s270 = scalar_lea.vmem [#allocation2], %s269
        %p271 = pneg %p45
        %p272 = pneg %p42
        %p273 = pneg %p66
        %p274 = pneg %p63
        %p275 = pneg %p87
        %p276 = pneg %p84
        %p277 = pneg %p108
        %p278 = pneg %p105
        %p279 = pneg %p129
        %p280 = pneg %p126
        %p281 = pneg %p155
        %p282 = pneg %p152
        %s283 = sand.u32 %s142, 1
        %s284 = scalar_lea.sflag [#allocation4], %s283
        %s285 = sand.u32 %s142, 1
        %s286 = smul.addr %s285, 128
        %s287 = scalar_lea.vmem [#allocation10], %s286
        %s288 = smul.u32 16, %s24
        %s289 = smul.u32 16, %s24
        %s290 = smul.u32 %s24, 128
        %s291 = scalar_lea.vmem [#allocation5], %s290
        %v292 = vld [vmem:[%s291] sm:$0xff]
        %v293 = vld [vmem:[%s291 + $0x8] sm:$0xff]
        %v294 = vld [vmem:[%s291 + $0x10] sm:$0xff]
        %v295 = vld [vmem:[%s291 + $0x18] sm:$0xff]
        %v296 = vld [vmem:[%s291 + $0x20] sm:$0xff]
        %v297 = vld [vmem:[%s291 + $0x28] sm:$0xff]
        %v298 = vld [vmem:[%s291 + $0x30] sm:$0xff]
        %v299 = vld [vmem:[%s291 + $0x38] sm:$0xff]
        %v300 = vld [vmem:[%s291 + $0x40] sm:$0xff]
        %v301 = vld [vmem:[%s291 + $0x48] sm:$0xff]
        %v302 = vld [vmem:[%s291 + $0x50] sm:$0xff]
        %v303 = vld [vmem:[%s291 + $0x58] sm:$0xff]
        %v304 = vld [vmem:[%s291 + $0x60] sm:$0xff]
        %v305 = vld [vmem:[%s291 + $0x68] sm:$0xff]
        %v306 = vld [vmem:[%s291 + $0x70] sm:$0xff]
        %v307 = vld [vmem:[%s291 + $0x78] sm:$0xff]
        %v308 = vld [vmem:[%s249] sm:$0xff]
        %v309 = vld [vmem:[%s249 + $0x8] sm:$0xff]
        %v310 = vld [vmem:[%s249 + $0x10] sm:$0xff]
        %v311 = vld [vmem:[%s249 + $0x18] sm:$0xff]
        %v312 = vld [vmem:[%s249 + $0x20] sm:$0xff]
        %v313 = vld [vmem:[%s249 + $0x28] sm:$0xff]
        %v314 = vld [vmem:[%s249 + $0x30] sm:$0xff]
        %v315 = vld [vmem:[%s249 + $0x38] sm:$0xff]
        %v316 = vld [vmem:[%s249 + $0x40] sm:$0xff]
        %v317 = vld [vmem:[%s249 + $0x48] sm:$0xff]
        %v318 = vld [vmem:[%s249 + $0x50] sm:$0xff]
        %v319 = vld [vmem:[%s249 + $0x58] sm:$0xff]
        %v320 = vld [vmem:[%s249 + $0x60] sm:$0xff]
        %v321 = vld [vmem:[%s249 + $0x68] sm:$0xff]
        %v322 = vld [vmem:[%s249 + $0x70] sm:$0xff]
        %v323 = vld [vmem:[%s249 + $0x78] sm:$0xff]
        %v324 = vld [vmem:[%s249 + $0x80] sm:$0xff]
        %v325 = vld [vmem:[%s249 + $0x88] sm:$0xff]
        %v326 = vld [vmem:[%s249 + $0x90] sm:$0xff]
        %v327 = vld [vmem:[%s249 + $0x98] sm:$0xff]
        %v328 = vld [vmem:[%s249 + $0xa0] sm:$0xff]
        %v329 = vld [vmem:[%s249 + $0xa8] sm:$0xff]
        %v330 = vld [vmem:[%s249 + $0xb0] sm:$0xff]
        %v331 = vld [vmem:[%s249 + $0xb8] sm:$0xff]
        %v332 = vld [vmem:[%s249 + $0xc0] sm:$0xff]
        %v333 = vld [vmem:[%s249 + $0xc8] sm:$0xff]
        %v334 = vld [vmem:[%s249 + $0xd0] sm:$0xff]
        %v335 = vld [vmem:[%s249 + $0xd8] sm:$0xff]
        %v336 = vld [vmem:[%s249 + $0xe0] sm:$0xff]
        %v337 = vld [vmem:[%s249 + $0xe8] sm:$0xff]
        %v338 = vld [vmem:[%s249 + $0xf0] sm:$0xff]
        %v339 = vld [vmem:[%s249 + $0xf8] sm:$0xff]
        %v340 = vld [vmem:[#allocation5] sm:$0xff]
        %v341 = vld [vmem:[#allocation5 + $0x8] sm:$0xff]
        %v342 = vld [vmem:[#allocation5 + $0x10] sm:$0xff]
        %v343 = vld [vmem:[#allocation5 + $0x18] sm:$0xff]
        %v344 = vld [vmem:[#allocation5 + $0x20] sm:$0xff]
        %v345 = vld [vmem:[#allocation5 + $0x28] sm:$0xff]
        %v346 = vld [vmem:[#allocation5 + $0x30] sm:$0xff]
        %v347 = vld [vmem:[#allocation5 + $0x38] sm:$0xff]
        %v348 = vld [vmem:[#allocation5 + $0x40] sm:$0xff]
        %v349 = vld [vmem:[#allocation5 + $0x48] sm:$0xff]
        %v350 = vld [vmem:[#allocation5 + $0x50] sm:$0xff]
        %v351 = vld [vmem:[#allocation5 + $0x58] sm:$0xff]
        %v352 = vld [vmem:[#allocation5 + $0x60] sm:$0xff]
        %v353 = vld [vmem:[#allocation5 + $0x68] sm:$0xff]
        %v354 = vld [vmem:[#allocation5 + $0x70] sm:$0xff]
        %v355 = vld [vmem:[#allocation5 + $0x78] sm:$0xff]
        %v356 = vld [vmem:[#allocation5 + $0x80] sm:$0xff]
        %v357 = vld [vmem:[#allocation5 + $0x88] sm:$0xff]
        %v358 = vld [vmem:[#allocation5 + $0x90] sm:$0xff]
        %v359 = vld [vmem:[#allocation5 + $0x98] sm:$0xff]
        %v360 = vld [vmem:[#allocation5 + $0xa0] sm:$0xff]
        %v361 = vld [vmem:[#allocation5 + $0xa8] sm:$0xff]
        %v362 = vld [vmem:[#allocation5 + $0xb0] sm:$0xff]
        %v363 = vld [vmem:[#allocation5 + $0xb8] sm:$0xff]
        %v364 = vld [vmem:[#allocation5 + $0xc0] sm:$0xff]
        %v365 = vld [vmem:[#allocation5 + $0xc8] sm:$0xff]
        %v366 = vld [vmem:[#allocation5 + $0xd0] sm:$0xff]
        %v367 = vld [vmem:[#allocation5 + $0xd8] sm:$0xff]
        %v368 = vld [vmem:[#allocation5 + $0xe0] sm:$0xff]
        %v369 = vld [vmem:[#allocation5 + $0xe8] sm:$0xff]
        %v370 = vld [vmem:[#allocation5 + $0xf0] sm:$0xff]
        %v371 = vld [vmem:[#allocation5 + $0xf8] sm:$0xff]
        %372 = vmatprep.subr.mxu0 0.0
        %373 = vmatpush1.msra.mxu0 %v340
        %374 = vmatprep.subr.mxu0 0.0
        %375 = vmatpush1.msra.mxu0 %v341
        %376 = vmatprep.subr.mxu0 0.0
        %377 = vmatpush1.msra.mxu0 %v342
        %378 = vmatprep.subr.mxu0 0.0
        %379 = vmatpush1.msra.mxu0 %v343
        %380 = vmatprep.subr.mxu0 0.0
        %381 = vmatpush1.msra.mxu0 %v344
        %382 = vmatprep.subr.mxu0 0.0
        %383 = vmatpush1.msra.mxu0 %v345
        %384 = vmatprep.subr.mxu0 0.0
        %385 = vmatpush1.msra.mxu0 %v346
        %386 = vmatprep.subr.mxu0 0.0
        %387 = vmatpush1.msra.mxu0 %v347
        %388 = vmatprep.subr.mxu0 0.0
        %389 = vmatpush1.msra.mxu0 %v348
        %390 = vmatprep.subr.mxu0 0.0
        %391 = vmatpush1.msra.mxu0 %v349
        %392 = vmatprep.subr.mxu0 0.0
        %393 = vmatpush1.msra.mxu0 %v350
        %394 = vmatprep.subr.mxu0 0.0
        %395 = vmatpush1.msra.mxu0 %v351
        %396 = vmatprep.subr.mxu0 0.0
        %397 = vmatpush1.msra.mxu0 %v352
        %398 = vmatprep.subr.mxu0 0.0
        %399 = vmatpush1.msra.mxu0 %v353
        %400 = vmatprep.subr.mxu0 0.0
        %401 = vmatpush1.msra.mxu0 %v354
        %402 = vmatprep.subr.mxu0 0.0
        %403 = vmatpush1.msra.mxu0 %v355
        %404 = vmatprep.subr.mxu0 0.0
        %405 = vmatpush1.msra.mxu0 %v356
        %406 = vmatprep.subr.mxu0 0.0
        %407 = vmatpush1.msra.mxu0 %v357
        %408 = vmatprep.subr.mxu0 0.0
        %409 = vmatpush1.msra.mxu0 %v358
        %410 = vmatprep.subr.mxu0 0.0
        %411 = vmatpush1.msra.mxu0 %v359
        %412 = vmatprep.subr.mxu0 0.0
        %413 = vmatpush1.msra.mxu0 %v360
        %414 = vmatprep.subr.mxu0 0.0
        %415 = vmatpush1.msra.mxu0 %v361
        %416 = vmatprep.subr.mxu0 0.0
        %417 = vmatpush1.msra.mxu0 %v362
        %418 = vmatprep.subr.mxu0 0.0
        %419 = vmatpush1.msra.mxu0 %v363
        %420 = vmatprep.subr.mxu0 0.0
        %421 = vmatpush1.msra.mxu0 %v364
        %422 = vmatprep.subr.mxu0 0.0
        %423 = vmatpush1.msra.mxu0 %v365
        %424 = vmatprep.subr.mxu0 0.0
        %425 = vmatpush1.msra.mxu0 %v366
        %426 = vmatprep.subr.mxu0 0.0
        %427 = vmatpush1.msra.mxu0 %v367
        %428 = vmatprep.subr.mxu0 0.0
        %429 = vmatpush1.msra.mxu0 %v368
        %430 = vmatprep.subr.mxu0 0.0
        %431 = vmatpush1.msra.mxu0 %v369
        %432 = vmatprep.subr.mxu0 0.0
        %433 = vmatpush1.msra.mxu0 %v370
        %434 = vmatprep.subr.mxu0 0.0
        %435 = vmatpush1.msra.mxu0 %v371
        %436 = vmatprep.mubr.f32.mxu0 %v309
        %437 = vmatmul.mubr.f32.gmra.mrb[0].mxu0 %v308
        %v438 = vpop.f32.mrb[0].mxu0
        %v439 = vadd.f32 0.0, %v438
        %v440 = vpop.f32.mrb[0].mxu0
        %441 = vmatprep.mubr.f32.mxu0 %v311
        %442 = vmatmul.mubr.f32.gmra.mrb[0].mxu0 %v310
        %v443 = vpop.f32.mrb[0].mxu0
        %v444 = vadd.f32 0.0, %v443
        %v445 = vpop.f32.mrb[0].mxu0
        %446 = vmatprep.mubr.f32.mxu0 %v313
        %447 = vmatmul.mubr.f32.gmra.mrb[0].mxu0 %v312
        %v448 = vpop.f32.mrb[0].mxu0
        %v449 = vadd.f32 0.0, %v448
        %v450 = vpop.f32.mrb[0].mxu0
        %451 = vmatprep.mubr.f32.mxu0 %v315
        %452 = vmatmul.mubr.f32.gmra.mrb[0].mxu0 %v314
        %v453 = vpop.f32.mrb[0].mxu0
        %v454 = vadd.f32 0.0, %v453
        %v455 = vpop.f32.mrb[0].mxu0
        %456 = vmatprep.mubr.f32.mxu0 %v317
        %457 = vmatmul.mubr.f32.gmra.mrb[0].mxu0 %v316
        %v458 = vpop.f32.mrb[0].mxu0
        %v459 = vadd.f32 0.0, %v458
        %v460 = vpop.f32.mrb[0].mxu0
        %461 = vmatprep.mubr.f32.mxu0 %v319
        %462 = vmatmul.mubr.f32.gmra.mrb[0].mxu0 %v318
        %v463 = vpop.f32.mrb[0].mxu0
        %v464 = vadd.f32 0.0, %v463
        %v465 = vpop.f32.mrb[0].mxu0
        %466 = vmatprep.mubr.f32.mxu0 %v321
        %467 = vmatmul.mubr.f32.gmra.mrb[0].mxu0 %v320
        %v468 = vpop.f32.mrb[0].mxu0
        %v469 = vadd.f32 0.0, %v468
        %v470 = vpop.f32.mrb[0].mxu0
        %471 = vmatprep.mubr.f32.mxu0 %v323
        %472 = vmatmul.mubr.f32.gmra.mrb[0].mxu0 %v322
        %v473 = vpop.f32.mrb[0].mxu0
        %v474 = vadd.f32 0.0, %v473
        %v475 = vpop.f32.mrb[0].mxu0
        %476 = vmatprep.mubr.f32.mxu0 %v325
        %477 = vmatmul.mubr.f32.gmra.mrb[0].mxu0 %v324
        %v478 = vpop.f32.mrb[0].mxu0
        %v479 = vadd.f32 0.0, %v478
        %v480 = vpop.f32.mrb[0].mxu0
        %481 = vmatprep.mubr.f32.mxu0 %v327
        %482 = vmatmul.mubr.f32.gmra.mrb[0].mxu0 %v326
        %v483 = vpop.f32.mrb[0].mxu0
        %v484 = vadd.f32 0.0, %v483
        %v485 = vpop.f32.mrb[0].mxu0
        %486 = vmatprep.mubr.f32.mxu0 %v329
        %487 = vmatmul.mubr.f32.gmra.mrb[0].mxu0 %v328
        %v488 = vpop.f32.mrb[0].mxu0
        %v489 = vadd.f32 0.0, %v488
        %v490 = vpop.f32.mrb[0].mxu0
        %491 = vmatprep.mubr.f32.mxu0 %v331
        %492 = vmatmul.mubr.f32.gmra.mrb[0].mxu0 %v330
        %v493 = vpop.f32.mrb[0].mxu0
        %v494 = vadd.f32 0.0, %v493
        %v495 = vpop.f32.mrb[0].mxu0
        %496 = vmatprep.mubr.f32.mxu0 %v333
        %497 = vmatmul.mubr.f32.gmra.mrb[0].mxu0 %v332
        %v498 = vpop.f32.mrb[0].mxu0
        %v499 = vadd.f32 0.0, %v498
        %v500 = vpop.f32.mrb[0].mxu0
        %501 = vmatprep.mubr.f32.mxu0 %v335
        %502 = vmatmul.mubr.f32.gmra.mrb[0].mxu0 %v334
        %v503 = vpop.f32.mrb[0].mxu0
        %v504 = vadd.f32 0.0, %v503
        %v505 = vpop.f32.mrb[0].mxu0
        %506 = vmatprep.mubr.f32.mxu0 %v337
        %507 = vmatmul.mubr.f32.gmra.mrb[0].mxu0 %v336
        %v508 = vpop.f32.mrb[0].mxu0
        %v509 = vadd.f32 0.0, %v508
        %v510 = vpop.f32.mrb[0].mxu0
        %511 = vmatprep.mubr.f32.mxu0 %v339
        %512 = vmatmul.mubr.f32.gmra.mrb[0].mxu0 %v338
        %v513 = vpop.f32.mrb[0].mxu0
        %v514 = vadd.f32 0.0, %v513
        %v515 = vpop.f32.mrb[0].mxu0
        %516 = vdwg.mxu0
        %v517 = vld [vmem:[#allocation7] sm:$0xff]
        %v518 = vld [vmem:[#allocation7 + $0x8] sm:$0xff]
        %v519 = vld [vmem:[#allocation7 + $0x10] sm:$0xff]
        %v520 = vld [vmem:[#allocation7 + $0x18] sm:$0xff]
        %v521 = vld [vmem:[#allocation7 + $0x20] sm:$0xff]
        %v522 = vld [vmem:[#allocation7 + $0x28] sm:$0xff]
        %v523 = vld [vmem:[#allocation7 + $0x30] sm:$0xff]
        %v524 = vld [vmem:[#allocation7 + $0x38] sm:$0xff]
        %v525 = vld [vmem:[#allocation7 + $0x40] sm:$0xff]
        %v526 = vld [vmem:[#allocation7 + $0x48] sm:$0xff]
        %v527 = vld [vmem:[#allocation7 + $0x50] sm:$0xff]
        %v528 = vld [vmem:[#allocation7 + $0x58] sm:$0xff]
        %v529 = vld [vmem:[#allocation7 + $0x60] sm:$0xff]
        %v530 = vld [vmem:[#allocation7 + $0x68] sm:$0xff]
        %v531 = vld [vmem:[#allocation7 + $0x70] sm:$0xff]
        %v532 = vld [vmem:[#allocation7 + $0x78] sm:$0xff]
        %v533 = vld [vmem:[#allocation8] sm:$0xff]
        %v534 = vld [vmem:[#allocation8 + $0x8] sm:$0xff]
        %v535 = vld [vmem:[#allocation8 + $0x10] sm:$0xff]
        %v536 = vld [vmem:[#allocation8 + $0x18] sm:$0xff]
        %v537 = vld [vmem:[#allocation8 + $0x20] sm:$0xff]
        %v538 = vld [vmem:[#allocation8 + $0x28] sm:$0xff]
        %v539 = vld [vmem:[#allocation8 + $0x30] sm:$0xff]
        %v540 = vld [vmem:[#allocation8 + $0x38] sm:$0xff]
        %v541 = vld [vmem:[#allocation8 + $0x40] sm:$0xff]
        %v542 = vld [vmem:[#allocation8 + $0x48] sm:$0xff]
        %v543 = vld [vmem:[#allocation8 + $0x50] sm:$0xff]
        %v544 = vld [vmem:[#allocation8 + $0x58] sm:$0xff]
        %v545 = vld [vmem:[#allocation8 + $0x60] sm:$0xff]
        %v546 = vld [vmem:[#allocation8 + $0x68] sm:$0xff]
        %v547 = vld [vmem:[#allocation8 + $0x70] sm:$0xff]
        %v548 = vld [vmem:[#allocation8 + $0x78] sm:$0xff]
        %549 = vmatprep.subr.mxu0 0.0
        %550 = vmatpush1.msra.mxu0 %v533
        %551 = vmatprep.subr.mxu0 0.0
        %552 = vmatpush1.msra.mxu0 %v534
        %553 = vmatprep.subr.mxu0 0.0
        %554 = vmatpush1.msra.mxu0 %v535
        %555 = vmatprep.subr.mxu0 0.0
        %556 = vmatpush1.msra.mxu0 %v536
        %557 = vmatprep.subr.mxu0 0.0
        %558 = vmatpush1.msra.mxu0 %v537
        %559 = vmatprep.subr.mxu0 0.0
        %560 = vmatpush1.msra.mxu0 %v538
        %561 = vmatprep.subr.mxu0 0.0
        %562 = vmatpush1.msra.mxu0 %v539
        %563 = vmatprep.subr.mxu0 0.0
        %564 = vmatpush1.msra.mxu0 %v540
        %565 = vmatprep.subr.mxu0 0.0
        %566 = vmatpush1.msra.mxu0 %v541
        %567 = vmatprep.subr.mxu0 0.0
        %568 = vmatpush1.msra.mxu0 %v542
        %569 = vmatprep.subr.mxu0 0.0
        %570 = vmatpush1.msra.mxu0 %v543
        %571 = vmatprep.subr.mxu0 0.0
        %572 = vmatpush1.msra.mxu0 %v544
        %573 = vmatprep.subr.mxu0 0.0
        %574 = vmatpush1.msra.mxu0 %v545
        %575 = vmatprep.subr.mxu0 0.0
        %576 = vmatpush1.msra.mxu0 %v546
        %577 = vmatprep.subr.mxu0 0.0
        %578 = vmatpush1.msra.mxu0 %v547
        %579 = vmatprep.subr.mxu0 0.0
        %580 = vmatpush1.msra.mxu0 %v548
        %581 = vmatprep.subr.mxu0 0.0
        %582 = vmatpush1.msra.mxu0 0.0
        %583 = vmatprep.subr.mxu0 0.0
        %584 = vmatpush1.msra.mxu0 0.0
        %585 = vmatprep.subr.mxu0 0.0
        %586 = vmatpush1.msra.mxu0 0.0
        %587 = vmatprep.subr.mxu0 0.0
        %588 = vmatpush1.msra.mxu0 0.0
        %589 = vmatprep.subr.mxu0 0.0
        %590 = vmatpush1.msra.mxu0 0.0
        %591 = vmatprep.subr.mxu0 0.0
        %592 = vmatpush1.msra.mxu0 0.0
        %593 = vmatprep.subr.mxu0 0.0
        %594 = vmatpush1.msra.mxu0 0.0
        %595 = vmatprep.subr.mxu0 0.0
        %596 = vmatpush1.msra.mxu0 0.0
        %597 = vmatprep.subr.mxu0 0.0
        %598 = vmatpush1.msra.mxu0 0.0
        %599 = vmatprep.subr.mxu0 0.0
        %600 = vmatpush1.msra.mxu0 0.0
        %601 = vmatprep.subr.mxu0 0.0
        %602 = vmatpush1.msra.mxu0 0.0
        %603 = vmatprep.subr.mxu0 0.0
        %604 = vmatpush1.msra.mxu0 0.0
        %605 = vmatprep.subr.mxu0 0.0
        %606 = vmatpush1.msra.mxu0 0.0
        %607 = vmatprep.subr.mxu0 0.0
        %608 = vmatpush1.msra.mxu0 0.0
        %609 = vmatprep.subr.mxu0 0.0
        %610 = vmatpush1.msra.mxu0 0.0
        %611 = vmatprep.subr.mxu0 0.0
        %612 = vmatpush1.msra.mxu0 0.0
        %613 = vmatprep.mubr.f32.mxu0 0.0
        %614 = vmatmul.mubr.f32.gmra.mrb[0].mxu0 %v439
        %v615 = vpop.f32.mrb[0].mxu0
        %v616 = vadd.f32 0.0, %v615
        %v617 = vpop.f32.mrb[0].mxu0
        %618 = vmatprep.mubr.f32.mxu0 0.0
        %619 = vmatmul.mubr.f32.gmra.mrb[0].mxu0 %v444
        %v620 = vpop.f32.mrb[0].mxu0
        %v621 = vadd.f32 0.0, %v620
        %v622 = vpop.f32.mrb[0].mxu0
        %623 = vmatprep.mubr.f32.mxu0 0.0
        %624 = vmatmul.mubr.f32.gmra.mrb[0].mxu0 %v449
        %v625 = vpop.f32.mrb[0].mxu0
        %v626 = vadd.f32 0.0, %v625
        %v627 = vpop.f32.mrb[0].mxu0
        %628 = vmatprep.mubr.f32.mxu0 0.0
        %629 = vmatmul.mubr.f32.gmra.mrb[0].mxu0 %v454
        %v630 = vpop.f32.mrb[0].mxu0
        %v631 = vadd.f32 0.0, %v630
        %v632 = vpop.f32.mrb[0].mxu0
        %633 = vmatprep.mubr.f32.mxu0 0.0
        %634 = vmatmul.mubr.f32.gmra.mrb[0].mxu0 %v459
        %v635 = vpop.f32.mrb[0].mxu0
        %v636 = vadd.f32 0.0, %v635
        %v637 = vpop.f32.mrb[0].mxu0
        %638 = vmatprep.mubr.f32.mxu0 0.0
        %639 = vmatmul.mubr.f32.gmra.mrb[0].mxu0 %v464
        %v640 = vpop.f32.mrb[0].mxu0
        %v641 = vadd.f32 0.0, %v640
        %v642 = vpop.f32.mrb[0].mxu0
        %643 = vmatprep.mubr.f32.mxu0 0.0
        %644 = vmatmul.mubr.f32.gmra.mrb[0].mxu0 %v469
        %v645 = vpop.f32.mrb[0].mxu0
        %v646 = vadd.f32 0.0, %v645
        %v647 = vpop.f32.mrb[0].mxu0
        %648 = vmatprep.mubr.f32.mxu0 0.0
        %649 = vmatmul.mubr.f32.gmra.mrb[0].mxu0 %v474
        %v650 = vpop.f32.mrb[0].mxu0
        %v651 = vadd.f32 0.0, %v650
        %v652 = vpop.f32.mrb[0].mxu0
        %653 = vmatprep.mubr.f32.mxu0 0.0
        %654 = vmatmul.mubr.f32.gmra.mrb[0].mxu0 %v479
        %v655 = vpop.f32.mrb[0].mxu0
        %v656 = vadd.f32 0.0, %v655
        %v657 = vpop.f32.mrb[0].mxu0
        %658 = vmatprep.mubr.f32.mxu0 0.0
        %659 = vmatmul.mubr.f32.gmra.mrb[0].mxu0 %v484
        %v660 = vpop.f32.mrb[0].mxu0
        %v661 = vadd.f32 0.0, %v660
        %v662 = vpop.f32.mrb[0].mxu0
        %663 = vmatprep.mubr.f32.mxu0 0.0
        %664 = vmatmul.mubr.f32.gmra.mrb[0].mxu0 %v489
        %v665 = vpop.f32.mrb[0].mxu0
        %v666 = vadd.f32 0.0, %v665
        %v667 = vpop.f32.mrb[0].mxu0
        %668 = vmatprep.mubr.f32.mxu0 0.0
        %669 = vmatmul.mubr.f32.gmra.mrb[0].mxu0 %v494
        %v670 = vpop.f32.mrb[0].mxu0
        %v671 = vadd.f32 0.0, %v670
        %v672 = vpop.f32.mrb[0].mxu0
        %673 = vmatprep.mubr.f32.mxu0 0.0
        %674 = vmatmul.mubr.f32.gmra.mrb[0].mxu0 %v499
        %v675 = vpop.f32.mrb[0].mxu0
        %v676 = vadd.f32 0.0, %v675
        %v677 = vpop.f32.mrb[0].mxu0
        %678 = vmatprep.mubr.f32.mxu0 0.0
        %679 = vmatmul.mubr.f32.gmra.mrb[0].mxu0 %v504
        %v680 = vpop.f32.mrb[0].mxu0
        %v681 = vadd.f32 0.0, %v680
        %v682 = vpop.f32.mrb[0].mxu0
        %683 = vmatprep.mubr.f32.mxu0 0.0
        %684 = vmatmul.mubr.f32.gmra.mrb[0].mxu0 %v509
        %v685 = vpop.f32.mrb[0].mxu0
        %v686 = vadd.f32 0.0, %v685
        %v687 = vpop.f32.mrb[0].mxu0
        %688 = vmatprep.mubr.f32.mxu0 0.0
        %689 = vmatmul.mubr.f32.gmra.mrb[0].mxu0 %v514
        %v690 = vpop.f32.mrb[0].mxu0
        %v691 = vadd.f32 0.0, %v690
        %v692 = vpop.f32.mrb[0].mxu0
        %693 = vdwg.mxu0
        %694 = vmatprep.subr.mxu0 0.0
        %695 = vmatpush1.msra.mxu0 %v517
        %696 = vmatprep.subr.mxu0 0.0
        %697 = vmatpush1.msra.mxu0 %v518
        %698 = vmatprep.subr.mxu0 0.0
        %699 = vmatpush1.msra.mxu0 %v519
        %700 = vmatprep.subr.mxu0 0.0
        %701 = vmatpush1.msra.mxu0 %v520
        %702 = vmatprep.subr.mxu0 0.0
        %703 = vmatpush1.msra.mxu0 %v521
        %704 = vmatprep.subr.mxu0 0.0
        %705 = vmatpush1.msra.mxu0 %v522
        %706 = vmatprep.subr.mxu0 0.0
        %707 = vmatpush1.msra.mxu0 %v523
        %708 = vmatprep.subr.mxu0 0.0
        %709 = vmatpush1.msra.mxu0 %v524
        %710 = vmatprep.subr.mxu0 0.0
        %711 = vmatpush1.msra.mxu0 %v525
        %712 = vmatprep.subr.mxu0 0.0
        %713 = vmatpush1.msra.mxu0 %v526
        %714 = vmatprep.subr.mxu0 0.0
        %715 = vmatpush1.msra.mxu0 %v527
        %716 = vmatprep.subr.mxu0 0.0
        %717 = vmatpush1.msra.mxu0 %v528
        %718 = vmatprep.subr.mxu0 0.0
        %719 = vmatpush1.msra.mxu0 %v529
        %720 = vmatprep.subr.mxu0 0.0
        %721 = vmatpush1.msra.mxu0 %v530
        %722 = vmatprep.subr.mxu0 0.0
        %723 = vmatpush1.msra.mxu0 %v531
        %724 = vmatprep.subr.mxu0 0.0
        %725 = vmatpush1.msra.mxu0 %v532
        %726 = vmatprep.subr.mxu0 0.0
        %727 = vmatpush1.msra.mxu0 0.0
        %728 = vmatprep.subr.mxu0 0.0
        %729 = vmatpush1.msra.mxu0 0.0
        %730 = vmatprep.subr.mxu0 0.0
        %731 = vmatpush1.msra.mxu0 0.0
        %732 = vmatprep.subr.mxu0 0.0
        %733 = vmatpush1.msra.mxu0 0.0
        %734 = vmatprep.subr.mxu0 0.0
        %735 = vmatpush1.msra.mxu0 0.0
        %736 = vmatprep.subr.mxu0 0.0
        %737 = vmatpush1.msra.mxu0 0.0
        %738 = vmatprep.subr.mxu0 0.0
        %739 = vmatpush1.msra.mxu0 0.0
        %740 = vmatprep.subr.mxu0 0.0
        %741 = vmatpush1.msra.mxu0 0.0
        %742 = vmatprep.subr.mxu0 0.0
        %743 = vmatpush1.msra.mxu0 0.0
        %744 = vmatprep.subr.mxu0 0.0
        %745 = vmatpush1.msra.mxu0 0.0
        %746 = vmatprep.subr.mxu0 0.0
        %747 = vmatpush1.msra.mxu0 0.0
        %748 = vmatprep.subr.mxu0 0.0
        %749 = vmatpush1.msra.mxu0 0.0
        %750 = vmatprep.subr.mxu0 0.0
        %751 = vmatpush1.msra.mxu0 0.0
        %752 = vmatprep.subr.mxu0 0.0
        %753 = vmatpush1.msra.mxu0 0.0
        %754 = vmatprep.subr.mxu0 0.0
        %755 = vmatpush1.msra.mxu0 0.0
        %756 = vmatprep.subr.mxu0 0.0
        %757 = vmatpush1.msra.mxu0 0.0
        %758 = vmatprep.mubr.f32.mxu0 0.0
        %759 = vmatmul.mubr.f32.gmra.mrb[0].mxu0 %v292
        %v760 = vpop.f32.mrb[0].mxu0
        %v761 = vadd.f32 %v616, %v760
        %v762 = vpop.f32.mrb[0].mxu0
        %763 = vmatprep.mubr.f32.mxu0 0.0
        %764 = vmatmul.mubr.f32.gmra.mrb[0].mxu0 %v293
        %v765 = vpop.f32.mrb[0].mxu0
        %v766 = vadd.f32 %v621, %v765
        %v767 = vpop.f32.mrb[0].mxu0
        %768 = vmatprep.mubr.f32.mxu0 0.0
        %769 = vmatmul.mubr.f32.gmra.mrb[0].mxu0 %v294
        %v770 = vpop.f32.mrb[0].mxu0
        %v771 = vadd.f32 %v626, %v770
        %v772 = vpop.f32.mrb[0].mxu0
        %773 = vmatprep.mubr.f32.mxu0 0.0
        %774 = vmatmul.mubr.f32.gmra.mrb[0].mxu0 %v295
        %v775 = vpop.f32.mrb[0].mxu0
        %v776 = vadd.f32 %v631, %v775
        %v777 = vpop.f32.mrb[0].mxu0
        %778 = vmatprep.mubr.f32.mxu0 0.0
        %779 = vmatmul.mubr.f32.gmra.mrb[0].mxu0 %v296
        %v780 = vpop.f32.mrb[0].mxu0
        %v781 = vadd.f32 %v636, %v780
        %v782 = vpop.f32.mrb[0].mxu0
        %783 = vmatprep.mubr.f32.mxu0 0.0
        %784 = vmatmul.mubr.f32.gmra.mrb[0].mxu0 %v297
        %v785 = vpop.f32.mrb[0].mxu0
        %v786 = vadd.f32 %v641, %v785
        %v787 = vpop.f32.mrb[0].mxu0
        %788 = vmatprep.mubr.f32.mxu0 0.0
        %789 = vmatmul.mubr.f32.gmra.mrb[0].mxu0 %v298
        %v790 = vpop.f32.mrb[0].mxu0
        %v791 = vadd.f32 %v646, %v790
        %v792 = vpop.f32.mrb[0].mxu0
        %793 = vmatprep.mubr.f32.mxu0 0.0
        %794 = vmatmul.mubr.f32.gmra.mrb[0].mxu0 %v299
        %v795 = vpop.f32.mrb[0].mxu0
        %v796 = vadd.f32 %v651, %v795
        %v797 = vpop.f32.mrb[0].mxu0
        %798 = vmatprep.mubr.f32.mxu0 0.0
        %799 = vmatmul.mubr.f32.gmra.mrb[0].mxu0 %v300
        %v800 = vpop.f32.mrb[0].mxu0
        %v801 = vadd.f32 %v656, %v800
        %v802 = vpop.f32.mrb[0].mxu0
        %803 = vmatprep.mubr.f32.mxu0 0.0
        %804 = vmatmul.mubr.f32.gmra.mrb[0].mxu0 %v301
        %v805 = vpop.f32.mrb[0].mxu0
        %v806 = vadd.f32 %v661, %v805
        %v807 = vpop.f32.mrb[0].mxu0
        %808 = vmatprep.mubr.f32.mxu0 0.0
        %809 = vmatmul.mubr.f32.gmra.mrb[0].mxu0 %v302
        %v810 = vpop.f32.mrb[0].mxu0
        %v811 = vadd.f32 %v666, %v810
        %v812 = vpop.f32.mrb[0].mxu0
        %813 = vmatprep.mubr.f32.mxu0 0.0
        %814 = vmatmul.mubr.f32.gmra.mrb[0].mxu0 %v303
        %v815 = vpop.f32.mrb[0].mxu0
        %v816 = vadd.f32 %v671, %v815
        %v817 = vpop.f32.mrb[0].mxu0
        %818 = vmatprep.mubr.f32.mxu0 0.0
        %819 = vmatmul.mubr.f32.gmra.mrb[0].mxu0 %v304
        %v820 = vpop.f32.mrb[0].mxu0
        %v821 = vadd.f32 %v676, %v820
        %v822 = vpop.f32.mrb[0].mxu0
        %823 = vmatprep.mubr.f32.mxu0 0.0
        %824 = vmatmul.mubr.f32.gmra.mrb[0].mxu0 %v305
        %v825 = vpop.f32.mrb[0].mxu0
        %v826 = vadd.f32 %v681, %v825
        %v827 = vpop.f32.mrb[0].mxu0
        %828 = vmatprep.mubr.f32.mxu0 0.0
        %829 = vmatmul.mubr.f32.gmra.mrb[0].mxu0 %v306
        %v830 = vpop.f32.mrb[0].mxu0
        %v831 = vadd.f32 %v686, %v830
        %v832 = vpop.f32.mrb[0].mxu0
        %833 = vmatprep.mubr.f32.mxu0 0.0
        %834 = vmatmul.mubr.f32.gmra.mrb[0].mxu0 %v307
        %v835 = vpop.f32.mrb[0].mxu0
        %v836 = vadd.f32 %v691, %v835
        %v837 = vpop.f32.mrb[0].mxu0
        %838 = vdwg.mxu0
        %v839 = vld [vmem:[%s4] sm:$0x1]
        %v841 = vlaneseq
        %v842 = vshrl.u32 %v841, 7
        %v843 = vsub.s32 0, %v842
        %v844 = vrot.slane %v839, %v843
        %v846 = vadd.f32 %v761, %v844
        %v847 = vadd.f32 %v766, %v844
        %v848 = vadd.f32 %v771, %v844
        %v849 = vadd.f32 %v776, %v844
        %v850 = vadd.f32 %v781, %v844
        %v851 = vadd.f32 %v786, %v844
        %v852 = vadd.f32 %v791, %v844
        %v853 = vadd.f32 %v796, %v844
        %v854 = vadd.f32 %v801, %v844
        %v855 = vadd.f32 %v806, %v844
        %v856 = vadd.f32 %v811, %v844
        %v857 = vadd.f32 %v816, %v844
        %v858 = vadd.f32 %v821, %v844
        %v859 = vadd.f32 %v826, %v844
        %v860 = vadd.f32 %v831, %v844
        %v861 = vadd.f32 %v836, %v844
        %v862 = vmax.f32 %v846, 0.0
        %v863 = vmax.f32 %v847, 0.0
        %v864 = vmax.f32 %v848, 0.0
        %v865 = vmax.f32 %v849, 0.0
        %v866 = vmax.f32 %v850, 0.0
        %v867 = vmax.f32 %v851, 0.0
        %v868 = vmax.f32 %v852, 0.0
        %v869 = vmax.f32 %v853, 0.0
        %v870 = vmax.f32 %v854, 0.0
        %v871 = vmax.f32 %v855, 0.0
        %v872 = vmax.f32 %v856, 0.0
        %v873 = vmax.f32 %v857, 0.0
        %v874 = vmax.f32 %v858, 0.0
        %v875 = vmax.f32 %v859, 0.0
        %v876 = vmax.f32 %v860, 0.0
        %v877 = vmax.f32 %v861, 0.0
        %878 = vst [vmem:[%s287] sm:$0xff] %v862
        %879 = vst [vmem:[%s287 + $0x8] sm:$0xff] %v863
        %880 = vst [vmem:[%s287 + $0x10] sm:$0xff] %v864
        %881 = vst [vmem:[%s287 + $0x18] sm:$0xff] %v865
        %882 = vst [vmem:[%s287 + $0x20] sm:$0xff] %v866
        %883 = vst [vmem:[%s287 + $0x28] sm:$0xff] %v867
        %884 = vst [vmem:[%s287 + $0x30] sm:$0xff] %v868
        %885 = vst [vmem:[%s287 + $0x38] sm:$0xff] %v869
        %886 = vst [vmem:[%s287 + $0x40] sm:$0xff] %v870
        %887 = vst [vmem:[%s287 + $0x48] sm:$0xff] %v871
        %888 = vst [vmem:[%s287 + $0x50] sm:$0xff] %v872
        %889 = vst [vmem:[%s287 + $0x58] sm:$0xff] %v873
        %890 = vst [vmem:[%s287 + $0x60] sm:$0xff] %v874
        %891 = vst [vmem:[%s287 + $0x68] sm:$0xff] %v875
        %892 = vst [vmem:[%s287 + $0x70] sm:$0xff] %v876
        %893 = vst [vmem:[%s287 + $0x78] sm:$0xff] %v877
        %s894 = sand.u32 %s142, 1
        %s895 = scalar_lea.sflag [#allocation4], %s894
        %s896 = sand.u32 %s142, 1
        %s897 = smul.addr %s896, 128
        %s898 = scalar_lea.vmem [#allocation10], %s897
        // Predicated region
        $region57: #{tpu_custom_call.1} parent=39 // pred_check
          %p899 = pneg %p152
        $region58: #{tpu_custom_call.1} parent=39 // pred_check_branch
          %901 = sbr.rel (%p899) target = $region60
        $region59: #{tpu_custom_call.1} parent=39 // pred_region
          %s902 = smul.u32 16, %s24
          %s904 = ssub.s32 2048, 2048
          %905 = vsyncadd %s895, %s904
          %s906 = smul.addr %s902, 128
          %s907 = scalar_lea.hbm %s5, %s906
          %s908 = sshll.u32 %s898, 4
          %s909 = int_to_ptr.vmem [resolvable:$true] %s908
          %914 = dma.vmem_to_hbm [thread:$0]  %s909, 2048, %s907, %s895, 128, 128, 8
        $region60: #{tpu_custom_call.1} parent=39 // pred_fallthru
          _
      $region40: #{tpu_custom_call.1} parent=5 // pred_fallthru
        _
      %p915 = scmp.le.s32.totalorder 2, %s19
      // Predicated region
      $region61: #{tpu_custom_call.1} parent=5 // pred_check
        %p916 = pneg %p915
      $region62: #{tpu_custom_call.1} parent=5 // pred_check_branch
        %918 = sbr.rel (%p916) target = $region64
      $region63: #{tpu_custom_call.1} parent=5 // pred_region
        %s919 = ssub.s32 %s19, 2
        // Predicated region
        $region65: #{tpu_custom_call.1} parent=63 // pred_check
          %p920 = pneg %p158
        $region66: #{tpu_custom_call.1} parent=63 // pred_check_branch
          %922 = sbr.rel (%p920) target = $region68
        $region67: #{tpu_custom_call.1} parent=63 // pred_region
          %s923 = sand.u32 %s143, 1
          %s924 = scalar_lea.sflag [#allocation4], %s923
          %s925 = sand.u32 %s143, 1
          %s926 = smul.addr %s925, 128
          %s927 = scalar_lea.vmem [#allocation10], %s926
          %928 = dma.done %s924, 2048
        $region68: #{tpu_custom_call.1} parent=63 // pred_fallthru
          _
      $region64: #{tpu_custom_call.1} parent=5 // pred_fallthru
        _
    $region6: #{tpu_custom_call.1} parent=1 // loop_footer
      %s23 = sadd.s32 1, %s19
    $region7: #{tpu_custom_call.1} parent=1 // loop_footer_branch
      %18 = sbr.rel target = $region3
    $region8: #{tpu_custom_call.1} parent=1 // loop_exit
      _
    %929 = vsyncpa [#allocation3], 1
    %s930 = scalar_lea.sflag [#allocation3], 1
    %931 = vsyncpa %s930, 1
    %932 = vsyncpa [#allocation6], 1
    %933 = vsyncpa [#allocation9], 1
    %934 = vsyncpa [#allocation4], 1
    %s935 = scalar_lea.sflag [#allocation4], 1
    %936 = vsyncpa %s935, 1

</llo_original>
